<compile_context>
chip_gen: v7x
topology: tpu7x:2x2x1
jax: 0.10.0
libtpu: 0.0.40
codegen_flags: <defaults>
</compile_context>

<pallas_src>
import jax
import jax.numpy as jnp
from jax.experimental import pallas as pl
from jax.experimental.pallas import tpu as pltpu


def _critic_kernel(x_ref, w1_ref, b1_ref, w2_ref, b2_ref, w3_ref, b3_ref, o_ref):
    # x_ref:  (block_b, D_in)  f32  (cast to bf16 in-kernel)
    # w1_ref: (D_in, fc1)      bf16     b1_ref: (1, fc1) f32
    # w2_ref: (fc1, fc2)       bf16     b2_ref: (1, fc2) f32
    # w3_ref: (1, fc2)         f32      b3_ref: (1, 1)   f32 (SMEM scalar)
    # o_ref:  (1, block_b)     f32      lane-dense row of values
    x = x_ref[...].astype(jnp.bfloat16)
    h1 = jnp.dot(x, w1_ref[...], preferred_element_type=jnp.float32)
    h1 = jnp.maximum(h1 + b1_ref[...], 0.0)                        # (block_b, fc1) f32
    h2 = jnp.dot(h1.astype(jnp.bfloat16), w2_ref[...],
                 preferred_element_type=jnp.float32)
    h2 = jnp.maximum(h2 + b2_ref[...], 0.0)                        # (block_b, fc2) f32
    # Final Linear(fc2 -> 1): N=1 MXU matmul is maximally lane-sparse, so do it
    # as broadcast multiply (VPU) + last-axis reduce (XLU) instead.
    v = jnp.sum(h2 * w3_ref[...], axis=-1) + b3_ref[0, 0]          # (block_b,)
    o_ref[...] = v[None, :].astype(o_ref.dtype)


def _round_up(x, m):
    return ((x + m - 1) // m) * m


def _select_block_b(B):
    # Target >= 2 tiles when B allows it (keeps both v7x TensorCores busy via
    # dimension_semantics=("parallel",)); cap at 2048 rows so the f32 h1/h2
    # intermediates stay comfortably inside scoped VMEM on all generations.
    blk = _round_up(pl.cdiv(B, 2), 256)
    blk = max(256, min(2048, blk))
    # Never use a tile taller than the (sublane-rounded) batch itself.
    return min(blk, _round_up(B, 8))


@jax.jit
def critic_forward(state, w1_bf16, b1, w2_bf16, b2, w3_row, b3):
    """Pallas forward pass of the PPO critic.

    state:   [B, D_in] float32
    w1_bf16: [D_in, fc1] bf16, b1: [1, fc1] f32
    w2_bf16: [fc1, fc2]  bf16, b2: [1, fc2] f32
    w3_row:  [1, fc2]    f32,  b3: [1, 1]   f32
    returns: [B, 1] float32
    """
    B, D_in = state.shape
    fc1 = w1_bf16.shape[1]
    fc2 = w2_bf16.shape[1]

    block_b = _select_block_b(B)
    num_tiles = pl.cdiv(B, block_b)   # ragged last tile handled by Pallas clamping

    cost = pl.CostEstimate(
        flops=2 * B * (D_in * fc1 + fc1 * fc2 + fc2),
        transcendentals=0,
        bytes_accessed=(B * (D_in * 4 + 4)
                        + D_in * fc1 * 2 + fc1 * 4
                        + fc1 * fc2 * 2 + fc2 * 4
                        + fc2 * 4 + 4),
    )

    in_specs = [
        pl.BlockSpec((block_b, D_in), lambda i: (i, 0)),    # x tile (pipelined)
        pl.BlockSpec((D_in, fc1), lambda i: (0, 0)),        # W1 (resident)
        pl.BlockSpec((1, fc1), lambda i: (0, 0)),           # b1
        pl.BlockSpec((fc1, fc2), lambda i: (0, 0)),         # W2 (resident)
        pl.BlockSpec((1, fc2), lambda i: (0, 0)),           # b2
        pl.BlockSpec((1, fc2), lambda i: (0, 0)),           # W3 as a row
        pl.BlockSpec(memory_space=pltpu.MemorySpace.SMEM),  # b3 scalar in SMEM
    ]
    # Lane-dense output: one (1, block_b) row of values per grid step.
    out_specs = pl.BlockSpec((1, block_b), lambda i: (i, 0))

    out = pl.pallas_call(
        _critic_kernel,
        out_shape=jax.ShapeDtypeStruct((num_tiles, block_b), jnp.float32),
        grid_spec=pltpu.PrefetchScalarGridSpec(
            num_scalar_prefetch=0,
            grid=(num_tiles,),
            in_specs=in_specs,
            out_specs=out_specs,
        ),
        compiler_params=pltpu.CompilerParams(
            dimension_semantics=("parallel",),
            vmem_limit_bytes=32 * 1024 * 1024,   # v5e default is 16 MiB; give headroom
        ),
        cost_estimate=cost,
    )(state, w1_bf16, b1, w2_bf16, b2, w3_row, b3)

    return out.reshape(num_tiles * block_b, 1)[:B]


def init_critic_params(key, input_dims, fc1_dims=256, fc2_dims=256):
    """Deterministic f32 parameter init (mirrors nn.Linear shapes, pre-transposed)."""
    k1, k2, k3, k4, k5, k6 = jax.random.split(key, 6)
    scale1 = 1.0 / jnp.sqrt(input_dims)
    scale2 = 1.0 / jnp.sqrt(fc1_dims)
    scale3 = 1.0 / jnp.sqrt(fc2_dims)
    w1 = jax.random.uniform(k1, (input_dims, fc1_dims), jnp.float32, -scale1, scale1)
    b1 = jax.random.uniform(k2, (1, fc1_dims), jnp.float32, -scale1, scale1)
    w2 = jax.random.uniform(k3, (fc1_dims, fc2_dims), jnp.float32, -scale2, scale2)
    b2 = jax.random.uniform(k4, (1, fc2_dims), jnp.float32, -scale2, scale2)
    w3 = jax.random.uniform(k5, (fc2_dims, 1), jnp.float32, -scale3, scale3)
    b3 = jax.random.uniform(k6, (1, 1), jnp.float32, -scale3, scale3)
    return w1, b1, w2, b2, w3, b3


def prepare_critic_params(w1, b1, w2, b2, w3, b3):
    """One-time conversion to the kernel's storage layout (outside the hot path)."""
    fc2 = w2.shape[1]
    return (w1.astype(jnp.bfloat16),
            b1.astype(jnp.float32),
            w2.astype(jnp.bfloat16),
            b2.astype(jnp.float32),
            w3.reshape(1, fc2).astype(jnp.float32),
            b3.astype(jnp.float32))


def critic_forward_ref_f32(state, w1, b1, w2, b2, w3, b3):
    """Pure f32 reference (module semantics)."""
    hp = jax.lax.Precision.HIGHEST
    h1 = jnp.maximum(jnp.dot(state, w1, precision=hp) + b1, 0.0)
    h2 = jnp.maximum(jnp.dot(h1, w2, precision=hp) + b2, 0.0)
    return jnp.dot(h2, w3, precision=hp) + b3


def critic_forward_ref_bf16(state, w1, b1, w2, b2, w3, b3):
    """Reference mirroring the kernel's bf16-operand / f32-accumulate path."""
    hp = jax.lax.Precision.HIGHEST
    r = lambda a: a.astype(jnp.bfloat16).astype(jnp.float32)
    h1 = jnp.maximum(jnp.dot(r(state), r(w1), precision=hp) + b1, 0.0)
    h2 = jnp.maximum(jnp.dot(r(h1), r(w2), precision=hp) + b2, 0.0)
    return jnp.dot(h2, w3, precision=hp) + b3


if __name__ == "__main__":
    key = jax.random.PRNGKey(0)
    k_params, k_state = jax.random.split(key)

    batch = 8               # small test batch; block_b adapts (here 8, no raggedness)
    input_dims = 8          # e.g. an 8-dim observation vector
    fc1_dims, fc2_dims = 256, 256

    raw_params = init_critic_params(k_params, input_dims, fc1_dims, fc2_dims)
    kernel_params = prepare_critic_params(*raw_params)
    state = jax.random.normal(k_state, (batch, input_dims), jnp.float32)

    value = critic_forward(state, *kernel_params)
    value = jax.block_until_ready(value)

    # Tight check vs. a reference that mirrors the kernel's bf16 rounding.
    ref_bf16 = critic_forward_ref_bf16(state, *raw_params)
    # Loose check vs. the true f32 module semantics (bf16 MXU operands -> ~1e-3 rel err).
    ref_f32 = critic_forward_ref_f32(state, *raw_params)

    assert value.shape == (batch, 1)
    assert jnp.allclose(value, ref_bf16, atol=1e-3, rtol=1e-3)
    assert jnp.allclose(value, ref_f32, atol=2e-2, rtol=2e-2)

    print("KERNEL_OK")
</pallas_src>

<mosaic_0001>
module attributes {stable_mosaic.version = 11 : i64} {
  func.func @_critic_kernel(%arg0: i32, %arg1: memref<8x8xf32, #tpu.memory_space<vmem>>, %arg2: memref<8x256xbf16, #tpu.memory_space<vmem>>, %arg3: memref<1x256xf32, #tpu.memory_space<vmem>>, %arg4: memref<256x256xbf16, #tpu.memory_space<vmem>>, %arg5: memref<1x256xf32, #tpu.memory_space<vmem>>, %arg6: memref<1x256xf32, #tpu.memory_space<vmem>>, %arg7: memref<1x1xf32, #tpu.memory_space<smem>>, %arg8: memref<1x8xf32, #tpu.memory_space<vmem>>) attributes {dimension_semantics = [#tpu.dimension_semantics<parallel>], iteration_bounds = array<i64: 1>, scalar_prefetch = 0 : i64, scratch_operands = 0 : i64, tpu.core_type = #tpu.core_type<tc>, window_params = [{transform_indices = @transform_0, window_bounds = array<i64: 8, 8>}, {pipeline_mode = #tpu.pipeline_mode<synchronous>, transform_indices = @transform_1, window_bounds = array<i64: 8, 256>}, {pipeline_mode = #tpu.pipeline_mode<synchronous>, transform_indices = @transform_2, window_bounds = array<i64: 1, 256>}, {pipeline_mode = #tpu.pipeline_mode<synchronous>, transform_indices = @transform_3, window_bounds = array<i64: 256, 256>}, {pipeline_mode = #tpu.pipeline_mode<synchronous>, transform_indices = @transform_4, window_bounds = array<i64: 1, 256>}, {pipeline_mode = #tpu.pipeline_mode<synchronous>, transform_indices = @transform_5, window_bounds = array<i64: 1, 256>}, {transform_indices = @transform_6, window_bounds = array<i64: 1, 1>}, {transform_indices = @transform_7, window_bounds = array<i64: 1, 8>}]} {
    %c0 = arith.constant 0 : index
    %c0_0 = arith.constant 0 : index
    %0 = vector.load %arg1[%c0, %c0_0] : memref<8x8xf32, #tpu.memory_space<vmem>>, vector<8x8xf32>
    %1 = arith.truncf %0 : vector<8x8xf32> to vector<8x8xbf16>
    %c0_1 = arith.constant 0 : index
    %c0_2 = arith.constant 0 : index
    %2 = vector.load %arg2[%c0_1, %c0_2] : memref<8x256xbf16, #tpu.memory_space<vmem>>, vector<8x256xbf16>
    %cst = arith.constant dense<0.000000e+00> : vector<8x256xf32>
    %3 = tpu.matmul %1, %2, %cst {dimension_numbers = #tpu.dot_dimension_numbers<[1], [0], [0], [1], [0, 0, 1, 1], [], []>} : vector<8x8xbf16>, vector<8x256xbf16>, vector<8x256xf32> -> vector<8x256xf32>
    %c0_3 = arith.constant 0 : index
    %c0_4 = arith.constant 0 : index
    %4 = vector.load %arg3[%c0_3, %c0_4] : memref<1x256xf32, #tpu.memory_space<vmem>>, vector<1x256xf32>
    %5 = vector.broadcast %4 : vector<1x256xf32> to vector<8x256xf32>
    %6 = arith.addf %3, %5 : vector<8x256xf32>
    %cst_5 = arith.constant 0.000000e+00 : f32
    %7 = vector.broadcast %cst_5 : f32 to vector<8x256xf32>
    %8 = arith.maximumf %6, %7 : vector<8x256xf32>
    %9 = arith.truncf %8 : vector<8x256xf32> to vector<8x256xbf16>
    %c0_6 = arith.constant 0 : index
    %c0_7 = arith.constant 0 : index
    %10 = vector.load %arg4[%c0_6, %c0_7] : memref<256x256xbf16, #tpu.memory_space<vmem>>, vector<256x256xbf16>
    %cst_8 = arith.constant dense<0.000000e+00> : vector<8x256xf32>
    %11 = tpu.matmul %9, %10, %cst_8 {dimension_numbers = #tpu.dot_dimension_numbers<[1], [0], [0], [1], [0, 0, 1, 1], [], []>} : vector<8x256xbf16>, vector<256x256xbf16>, vector<8x256xf32> -> vector<8x256xf32>
    %c0_9 = arith.constant 0 : index
    %c0_10 = arith.constant 0 : index
    %12 = vector.load %arg5[%c0_9, %c0_10] : memref<1x256xf32, #tpu.memory_space<vmem>>, vector<1x256xf32>
    %13 = vector.broadcast %12 : vector<1x256xf32> to vector<8x256xf32>
    %14 = arith.addf %11, %13 : vector<8x256xf32>
    %cst_11 = arith.constant 0.000000e+00 : f32
    %15 = vector.broadcast %cst_11 : f32 to vector<8x256xf32>
    %16 = arith.maximumf %14, %15 : vector<8x256xf32>
    %c0_12 = arith.constant 0 : index
    %c0_13 = arith.constant 0 : index
    %17 = vector.load %arg6[%c0_12, %c0_13] : memref<1x256xf32, #tpu.memory_space<vmem>>, vector<1x256xf32>
    %18 = vector.broadcast %17 : vector<1x256xf32> to vector<8x256xf32>
    %19 = arith.mulf %16, %18 : vector<8x256xf32>
    %cst_14 = arith.constant dense<0.000000e+00> : vector<8xf32>
    %20 = vector.multi_reduction <add>, %19, %cst_14 [1] : vector<8x256xf32> to vector<8xf32>
    %c0_15 = arith.constant 0 : index
    %c0_16 = arith.constant 0 : index
    %21 = memref.load %arg7[%c0_15, %c0_16] : memref<1x1xf32, #tpu.memory_space<smem>>
    %22 = vector.broadcast %21 : f32 to vector<8xf32>
    %23 = arith.addf %20, %22 : vector<8xf32>
    %24 = vector.shape_cast %23 : vector<8xf32> to vector<1x8xf32>
    %c0_17 = arith.constant 0 : index
    %c0_18 = arith.constant 0 : index
    %25 = vector.load %arg8[%c0_17, %c0_18] : memref<1x8xf32, #tpu.memory_space<vmem>>, vector<1x8xf32>
    tpu.vector_store %arg8[%c0_17, %c0_18], %24 {strides = array<i32>} : memref<1x8xf32, #tpu.memory_space<vmem>>, vector<1x8xf32>,
    return
  }
  func.func @transform_0(%arg0: i32) -> (i32, i32) {
    %c0_i32 = arith.constant 0 : i32
    %c0_i32_0 = arith.constant 0 : i32
    return %arg0, %c0_i32 : i32, i32
  }
  func.func @transform_1(%arg0: i32) -> (i32, i32) {
    %c0_i32 = arith.constant 0 : i32
    %c0_i32_0 = arith.constant 0 : i32
    %c0_i32_1 = arith.constant 0 : i32
    return %c0_i32, %c0_i32_0 : i32, i32
  }
  func.func @transform_2(%arg0: i32) -> (i32, i32) {
    %c0_i32 = arith.constant 0 : i32
    %c0_i32_0 = arith.constant 0 : i32
    %c0_i32_1 = arith.constant 0 : i32
    return %c0_i32, %c0_i32_0 : i32, i32
  }
  func.func @transform_3(%arg0: i32) -> (i32, i32) {
    %c0_i32 = arith.constant 0 : i32
    %c0_i32_0 = arith.constant 0 : i32
    %c0_i32_1 = arith.constant 0 : i32
    return %c0_i32, %c0_i32_0 : i32, i32
  }
  func.func @transform_4(%arg0: i32) -> (i32, i32) {
    %c0_i32 = arith.constant 0 : i32
    %c0_i32_0 = arith.constant 0 : i32
    %c0_i32_1 = arith.constant 0 : i32
    return %c0_i32, %c0_i32_0 : i32, i32
  }
  func.func @transform_5(%arg0: i32) -> (i32, i32) {
    %c0_i32 = arith.constant 0 : i32
    %c0_i32_0 = arith.constant 0 : i32
    %c0_i32_1 = arith.constant 0 : i32
    return %c0_i32, %c0_i32_0 : i32, i32
  }
  func.func @transform_6(%arg0: i32) -> (i32, i32) {
    %c0_i32 = arith.constant 0 : i32
    %c0_i32_0 = arith.constant 0 : i32
    %c0_i32_1 = arith.constant 0 : i32
    return %c0_i32, %c0_i32_0 : i32, i32
  }
  func.func @transform_7(%arg0: i32) -> (i32, i32) {
    %c0_i32 = arith.constant 0 : i32
    %c0_i32_0 = arith.constant 0 : i32
    return %arg0, %c0_i32 : i32, i32
  }
}

</mosaic_0001>

<llo_original>
// kernel: critic_forward.1
$region0: #{critic_forward.1}
  #allocation0 [shape = 'u32[]', space=smem, size = 0x4, offset = 0x4, fixed_abs, tag = 'smem constant byte address 0x4 - core index']
  #allocation1 [shape = 'u32[144,128]{1,0:T(1,128)}', space=vmem, size = 0x12000, scoped, tag = 'internal scratch']
  #allocation2 [shape = 'f32[1,1]{1,0:T(1,128)S(6)}', space=smem, size = 0x200, scoped, tag = 'scoped memory for critic_forward.1']
  %s0 = inlined_call_operand.hbm [shape: f32[8,8], index: 0, kind: input, shape index: {}]
  %s1 = inlined_call_operand.hbm [shape: bf16[8,256], index: 1, kind: input, shape index: {}]
  %s2 = inlined_call_operand.vmem [shape: f32[1,256], index: 2, kind: input, shape index: {}]
  %s3 = inlined_call_operand.hbm [shape: bf16[256,256], index: 3, kind: input, shape index: {}]
  %s4 = inlined_call_operand.vmem [shape: f32[1,256], index: 4, kind: input, shape index: {}]
  %s5 = inlined_call_operand.vmem [shape: f32[1,256], index: 5, kind: input, shape index: {}]
  %s6 = inlined_call_operand.<no memory space> [shape: f32[1,1], index: 6, kind: input, shape index: {}]
  %s7 = inlined_call_operand.hbm [shape: f32[1,8], index: 7, kind: output, shape index: {}]
  %s8 = sld [smem:[#allocation0]]
  $region50: #{critic_forward.1} parent=0
    _
  %s10 = ssub.s32 1, %s8
  %s11 = scalar_select 0, %s10, %s8
  %12 = sst [smem:[#allocation2]] %s6
  $region1: #{critic_forward.1} parent=0
    #allocation3 [shape = 'u8[4096]{0}', space=vmem, size = 0x1000, scoped, tag = 'input window, operand 0, single buffered']
    #allocation4 [shape = 's32[1]{0}', space=sflag, size = 0x4, scoped, tag = 'scoped memory for critic_forward.1']
    #allocation5 [shape = 's32[1]{0}', space=sflag, size = 0x4, scoped, tag = 'scoped memory for critic_forward.1']
    #allocation6 [shape = 'u8[4096]{0}', space=vmem, size = 0x1000, scoped, tag = 'input window, operand 1, single buffered']
    #allocation7 [shape = 's32[1]{0}', space=sflag, size = 0x4, scoped, tag = 'scoped memory for critic_forward.1']
    #allocation8 [shape = 'u8[131072]{0}', space=vmem, size = 0x20000, scoped, tag = 'input window, operand 3, single buffered']
    #allocation9 [shape = 'u8[512]{0}', space=vmem, size = 0x400, scoped, tag = 'output window, operand 0, single buffered']
    %13 = vsyncpa [#allocation4], 0
    %14 = vsyncpa [#allocation7], 0
    %15 = vsyncpa [#allocation5], 0
    // Predicated region
    $region2: #{critic_forward.1} parent=1 // pred_check
      _
    $region3: #{critic_forward.1} parent=1 // pred_check_branch
      %17 = sbr.rel (0) target = $region5
    $region4: #{critic_forward.1} parent=1 // pred_region
      %s19 = ssub.s32 128, 128
      %20 = vsyncadd [#allocation4], %s19
      %s22 = sshll.u32 [#allocation3], 4
      %s23 = int_to_ptr.vmem [resolvable:$true] %s22
      %25 = dma.hbm_to_vmem [thread:$0]  %s0, 128, %s23, [#allocation4]
    $region5: #{critic_forward.1} parent=1 // pred_fallthru
      _
    // Predicated region
    $region6: #{critic_forward.1} parent=1 // pred_check
      _
    $region7: #{critic_forward.1} parent=1 // pred_check_branch
      %27 = sbr.rel (0) target = $region9
    $region8: #{critic_forward.1} parent=1 // pred_region
      %s29 = ssub.s32 128, 128
      %30 = vsyncadd [#allocation7], %s29
      %s32 = sshll.u32 [#allocation6], 4
      %s33 = int_to_ptr.vmem [resolvable:$true] %s32
      %35 = dma.hbm_to_vmem [thread:$0]  %s1, 128, %s33, [#allocation7]
    $region9: #{critic_forward.1} parent=1 // pred_fallthru
      _
    // Predicated region
    $region10: #{critic_forward.1} parent=1 // pred_check
      _
    $region11: #{critic_forward.1} parent=1 // pred_check_branch
      %37 = sbr.rel (0) target = $region13
    $region12: #{critic_forward.1} parent=1 // pred_region
      _
    $region13: #{critic_forward.1} parent=1 // pred_fallthru
      _
    // Predicated region
    $region14: #{critic_forward.1} parent=1 // pred_check
      _
    $region15: #{critic_forward.1} parent=1 // pred_check_branch
      %39 = sbr.rel (0) target = $region17
    $region16: #{critic_forward.1} parent=1 // pred_region
      %s41 = ssub.s32 4096, 4096
      %42 = vsyncadd [#allocation7], %s41
      %s43 = sshll.u32 [#allocation8], 4
      %s44 = int_to_ptr.vmem [resolvable:$true] %s43
      %49 = dma.hbm_to_vmem [thread:$0]  %s3, 4096, %s44, [#allocation7], 128, 128, 8
    $region17: #{critic_forward.1} parent=1 // pred_fallthru
      _
    // Predicated region
    $region18: #{critic_forward.1} parent=1 // pred_check
      _
    $region19: #{critic_forward.1} parent=1 // pred_check_branch
      %51 = sbr.rel (0) target = $region21
    $region20: #{critic_forward.1} parent=1 // pred_region
      _
    $region21: #{critic_forward.1} parent=1 // pred_fallthru
      _
    // Predicated region
    $region22: #{critic_forward.1} parent=1 // pred_check
      _
    $region23: #{critic_forward.1} parent=1 // pred_check_branch
      %53 = sbr.rel (0) target = $region25
    $region24: #{critic_forward.1} parent=1 // pred_region
      _
    $region25: #{critic_forward.1} parent=1 // pred_fallthru
      _
    // Predicated region
    $region26: #{critic_forward.1} parent=1 // pred_check
      _
    $region27: #{critic_forward.1} parent=1 // pred_check_branch
      %55 = sbr.rel (0) target = $region29
    $region28: #{critic_forward.1} parent=1 // pred_region
      _
    $region29: #{critic_forward.1} parent=1 // pred_fallthru
      _
    // Predicated region
    $region30: #{critic_forward.1} parent=1 // pred_check
      _
    $region31: #{critic_forward.1} parent=1 // pred_check_branch
      %57 = sbr.rel (0) target = $region33
    $region32: #{critic_forward.1} parent=1 // pred_region
      %58 = dma.done [#allocation4], 128
    $region33: #{critic_forward.1} parent=1 // pred_fallthru
      _
    // Predicated region
    $region34: #{critic_forward.1} parent=1 // pred_check
      _
    $region35: #{critic_forward.1} parent=1 // pred_check_branch
      %60 = sbr.rel (0) target = $region37
    $region36: #{critic_forward.1} parent=1 // pred_region
      %61 = dma.done [#allocation7], 128
    $region37: #{critic_forward.1} parent=1 // pred_fallthru
      _
    // Predicated region
    $region38: #{critic_forward.1} parent=1 // pred_check
      _
    $region39: #{critic_forward.1} parent=1 // pred_check_branch
      %63 = sbr.rel (0) target = $region41
    $region40: #{critic_forward.1} parent=1 // pred_region
      %64 = dma.done [#allocation7], 4096
    $region41: #{critic_forward.1} parent=1 // pred_fallthru
      _
    %v66 = vld [vmem:[#allocation3] sm:$0xff]
    %v67 = vpack.c.bf16 %v66, %v66
    %v68 = vld [vmem:[#allocation6] sm:$0xff]
    %v69 = vld [vmem:[%s2] sm:$0x3]
    %v71 = vlaneseq
    %v72 = vshrl.u32 %v71, 7
    %v73 = vsub.s32 0, %v72
    %v74 = vrot.slane %v69, %v73
    %v75 = vlaneseq
    %v76 = vshrl.u32 %v75, 7
    %v77 = vsub.s32 1, %v76
    %v78 = vrot.slane %v69, %v77
    %v82 = vunpack.c.l.b16 %v68
    %v83 = vunpack.c.h.b16 %v68
    %v84 = vpack.c.b16 %v82, %v82
    %v85 = vpack.c.b16 %v83, %v83
    %vm86 = vcmask 64512
    %v88 = vsel %vm86, %v67, 0
    %vm90 = vcmask 1043456
    %v92 = vsel %vm90, %v84, 0
    %v95 = vsel %vm90, %v85, 0
    %97 = vmatprep.subr.bf16.mxu0 %v95
    %98 = vmatpush1.bf16.msra.mxu0 %v92
    %99 = vmatprep.subr.bf16.mxu0 0
    %100 = vmatpush1.bf16.msra.mxu0 0
    %101 = vmatprep.subr.bf16.mxu0 0
    %102 = vmatpush1.bf16.msra.mxu0 0
    %103 = vmatprep.subr.bf16.mxu0 0
    %104 = vmatpush1.bf16.msra.mxu0 0
    %105 = vmatprep.subr.bf16.mxu0 0
    %106 = vmatpush1.bf16.msra.mxu0 0
    %107 = vmatprep.subr.bf16.mxu0 0
    %108 = vmatpush1.bf16.msra.mxu0 0
    %109 = vmatprep.subr.bf16.mxu0 0
    %110 = vmatpush1.bf16.msra.mxu0 0
    %111 = vmatprep.subr.bf16.mxu0 0
    %112 = vmatpush1.bf16.msra.mxu0 0
    %113 = vmatprep.subr.bf16.mxu0 0
    %114 = vmatpush1.bf16.msra.mxu0 0
    %115 = vmatprep.subr.bf16.mxu0 0
    %116 = vmatpush1.bf16.msra.mxu0 0
    %117 = vmatprep.subr.bf16.mxu0 0
    %118 = vmatpush1.bf16.msra.mxu0 0
    %119 = vmatprep.subr.bf16.mxu0 0
    %120 = vmatpush1.bf16.msra.mxu0 0
    %121 = vmatprep.subr.bf16.mxu0 0
    %122 = vmatpush1.bf16.msra.mxu0 0
    %123 = vmatprep.subr.bf16.mxu0 0
    %124 = vmatpush1.bf16.msra.mxu0 0
    %125 = vmatprep.subr.bf16.mxu0 0
    %126 = vmatpush1.bf16.msra.mxu0 0
    %127 = vmatprep.subr.bf16.mxu0 0
    %128 = vmatpush1.bf16.msra.mxu0 0
    %129 = vmatprep.mubr.bf16.mxu0 0
    %130 = vmatmul.mubr.bf16.gmra.mrb[0].mxu0 %v88
    %v131 = vpop.f32.mrb[0].mxu0
    %v132 = vadd.f32 %v74, %v131
    %v133 = vpop.f32.mrb[0].mxu0
    %v134 = vadd.f32 %v78, %v133
    %v135 = vpop.f32.mrb[0].mxu0
    %v136 = vpop.f32.mrb[0].mxu0
    %137 = vdwg.mxu0
    %v138 = vmax.f32 %v132, 0.0
    %v139 = vmax.f32 %v134, 0.0
    %v140 = vpack.c.bf16 %v138, %v138
    %v141 = vpack.c.bf16 %v139, %v139
    %v142 = vld [vmem:[#allocation8] sm:$0xff]
    %v143 = vld [vmem:[#allocation8 + $0x8] sm:$0xff]
    %v144 = vld [vmem:[#allocation8 + $0x10] sm:$0xff]
    %v145 = vld [vmem:[#allocation8 + $0x18] sm:$0xff]
    %v146 = vld [vmem:[#allocation8 + $0x20] sm:$0xff]
    %v147 = vld [vmem:[#allocation8 + $0x28] sm:$0xff]
    %v148 = vld [vmem:[#allocation8 + $0x30] sm:$0xff]
    %v149 = vld [vmem:[#allocation8 + $0x38] sm:$0xff]
    %v150 = vld [vmem:[#allocation8 + $0x40] sm:$0xff]
    %v151 = vld [vmem:[#allocation8 + $0x48] sm:$0xff]
    %v152 = vld [vmem:[#allocation8 + $0x50] sm:$0xff]
    %v153 = vld [vmem:[#allocation8 + $0x58] sm:$0xff]
    %v154 = vld [vmem:[#allocation8 + $0x60] sm:$0xff]
    %v155 = vld [vmem:[#allocation8 + $0x68] sm:$0xff]
    %v156 = vld [vmem:[#allocation8 + $0x70] sm:$0xff]
    %v157 = vld [vmem:[#allocation8 + $0x78] sm:$0xff]
    %v158 = vld [vmem:[#allocation8 + $0x80] sm:$0xff]
    %v159 = vld [vmem:[#allocation8 + $0x88] sm:$0xff]
    %v160 = vld [vmem:[#allocation8 + $0x90] sm:$0xff]
    %v161 = vld [vmem:[#allocation8 + $0x98] sm:$0xff]
    %v162 = vld [vmem:[#allocation8 + $0xa0] sm:$0xff]
    %v163 = vld [vmem:[#allocation8 + $0xa8] sm:$0xff]
    %v164 = vld [vmem:[#allocation8 + $0xb0] sm:$0xff]
    %v165 = vld [vmem:[#allocation8 + $0xb8] sm:$0xff]
    %v166 = vld [vmem:[#allocation8 + $0xc0] sm:$0xff]
    %v167 = vld [vmem:[#allocation8 + $0xc8] sm:$0xff]
    %v168 = vld [vmem:[#allocation8 + $0xd0] sm:$0xff]
    %v169 = vld [vmem:[#allocation8 + $0xd8] sm:$0xff]
    %v170 = vld [vmem:[#allocation8 + $0xe0] sm:$0xff]
    %v171 = vld [vmem:[#allocation8 + $0xe8] sm:$0xff]
    %v172 = vld [vmem:[#allocation8 + $0xf0] sm:$0xff]
    %v173 = vld [vmem:[#allocation8 + $0xf8] sm:$0xff]
    %v174 = vld [vmem:[%s4] sm:$0x3]
    %v176 = vlaneseq
    %v177 = vshrl.u32 %v176, 7
    %v178 = vsub.s32 0, %v177
    %v179 = vrot.slane %v174, %v178
    %v180 = vlaneseq
    %v181 = vshrl.u32 %v180, 7
    %v182 = vsub.s32 1, %v181
    %v183 = vrot.slane %v174, %v182
    %v218 = vunpack.c.l.b16 %v142
    %v219 = vunpack.c.h.b16 %v142
    %v220 = vunpack.c.l.b16 %v143
    %v221 = vunpack.c.h.b16 %v143
    %v222 = vunpack.c.l.b16 %v144
    %v223 = vunpack.c.h.b16 %v144
    %v224 = vunpack.c.l.b16 %v145
    %v225 = vunpack.c.h.b16 %v145
    %v226 = vunpack.c.l.b16 %v146
    %v227 = vunpack.c.h.b16 %v146
    %v228 = vunpack.c.l.b16 %v147
    %v229 = vunpack.c.h.b16 %v147
    %v230 = vunpack.c.l.b16 %v148
    %v231 = vunpack.c.h.b16 %v148
    %v232 = vunpack.c.l.b16 %v149
    %v233 = vunpack.c.h.b16 %v149
    %v234 = vunpack.c.l.b16 %v150
    %v235 = vunpack.c.h.b16 %v150
    %v236 = vunpack.c.l.b16 %v151
    %v237 = vunpack.c.h.b16 %v151
    %v238 = vunpack.c.l.b16 %v152
    %v239 = vunpack.c.h.b16 %v152
    %v240 = vunpack.c.l.b16 %v153
    %v241 = vunpack.c.h.b16 %v153
    %v242 = vunpack.c.l.b16 %v154
    %v243 = vunpack.c.h.b16 %v154
    %v244 = vunpack.c.l.b16 %v155
    %v245 = vunpack.c.h.b16 %v155
    %v246 = vunpack.c.l.b16 %v156
    %v247 = vunpack.c.h.b16 %v156
    %v248 = vunpack.c.l.b16 %v157
    %v249 = vunpack.c.h.b16 %v157
    %v250 = vunpack.c.l.b16 %v158
    %v251 = vunpack.c.h.b16 %v158
    %v252 = vunpack.c.l.b16 %v159
    %v253 = vunpack.c.h.b16 %v159
    %v254 = vunpack.c.l.b16 %v160
    %v255 = vunpack.c.h.b16 %v160
    %v256 = vunpack.c.l.b16 %v161
    %v257 = vunpack.c.h.b16 %v161
    %v258 = vunpack.c.l.b16 %v162
    %v259 = vunpack.c.h.b16 %v162
    %v260 = vunpack.c.l.b16 %v163
    %v261 = vunpack.c.h.b16 %v163
    %v262 = vunpack.c.l.b16 %v164
    %v263 = vunpack.c.h.b16 %v164
    %v264 = vunpack.c.l.b16 %v165
    %v265 = vunpack.c.h.b16 %v165
    %v266 = vunpack.c.l.b16 %v166
    %v267 = vunpack.c.h.b16 %v166
    %v268 = vunpack.c.l.b16 %v167
    %v269 = vunpack.c.h.b16 %v167
    %v270 = vunpack.c.l.b16 %v168
    %v271 = vunpack.c.h.b16 %v168
    %v272 = vunpack.c.l.b16 %v169
    %v273 = vunpack.c.h.b16 %v169
    %v274 = vunpack.c.l.b16 %v170
    %v275 = vunpack.c.h.b16 %v170
    %v276 = vunpack.c.l.b16 %v171
    %v277 = vunpack.c.h.b16 %v171
    %v278 = vunpack.c.l.b16 %v172
    %v279 = vunpack.c.h.b16 %v172
    %v280 = vunpack.c.l.b16 %v173
    %v281 = vunpack.c.h.b16 %v173
    %v282 = vpack.c.b16 %v220, %v218
    %v283 = vpack.c.b16 %v221, %v219
    %v284 = vpack.c.b16 %v224, %v222
    %v285 = vpack.c.b16 %v225, %v223
    %v286 = vpack.c.b16 %v228, %v226
    %v287 = vpack.c.b16 %v229, %v227
    %v288 = vpack.c.b16 %v232, %v230
    %v289 = vpack.c.b16 %v233, %v231
    %v290 = vpack.c.b16 %v236, %v234
    %v291 = vpack.c.b16 %v237, %v235
    %v292 = vpack.c.b16 %v240, %v238
    %v293 = vpack.c.b16 %v241, %v239
    %v294 = vpack.c.b16 %v244, %v242
    %v295 = vpack.c.b16 %v245, %v243
    %v296 = vpack.c.b16 %v248, %v246
    %v297 = vpack.c.b16 %v249, %v247
    %v298 = vpack.c.b16 %v252, %v250
    %v299 = vpack.c.b16 %v253, %v251
    %v300 = vpack.c.b16 %v256, %v254
    %v301 = vpack.c.b16 %v257, %v255
    %v302 = vpack.c.b16 %v260, %v258
    %v303 = vpack.c.b16 %v261, %v259
    %v304 = vpack.c.b16 %v264, %v262
    %v305 = vpack.c.b16 %v265, %v263
    %v306 = vpack.c.b16 %v268, %v266
    %v307 = vpack.c.b16 %v269, %v267
    %v308 = vpack.c.b16 %v272, %v270
    %v309 = vpack.c.b16 %v273, %v271
    %v310 = vpack.c.b16 %v276, %v274
    %v311 = vpack.c.b16 %v277, %v275
    %v312 = vpack.c.b16 %v280, %v278
    %v313 = vpack.c.b16 %v281, %v279
    %346 = vmatprep.subr.bf16.mxu0 %v283
    %347 = vmatpush1.bf16.msra.mxu0 %v282
    %348 = vmatprep.subr.bf16.mxu0 %v285
    %349 = vmatpush1.bf16.msra.mxu0 %v284
    %350 = vmatprep.subr.bf16.mxu0 %v287
    %351 = vmatpush1.bf16.msra.mxu0 %v286
    %352 = vmatprep.subr.bf16.mxu0 %v289
    %353 = vmatpush1.bf16.msra.mxu0 %v288
    %354 = vmatprep.subr.bf16.mxu0 %v291
    %355 = vmatpush1.bf16.msra.mxu0 %v290
    %356 = vmatprep.subr.bf16.mxu0 %v293
    %357 = vmatpush1.bf16.msra.mxu0 %v292
    %358 = vmatprep.subr.bf16.mxu0 %v295
    %359 = vmatpush1.bf16.msra.mxu0 %v294
    %360 = vmatprep.subr.bf16.mxu0 %v297
    %361 = vmatpush1.bf16.msra.mxu0 %v296
    %362 = vmatprep.subr.bf16.mxu0 %v299
    %363 = vmatpush1.bf16.msra.mxu0 %v298
    %364 = vmatprep.subr.bf16.mxu0 %v301
    %365 = vmatpush1.bf16.msra.mxu0 %v300
    %366 = vmatprep.subr.bf16.mxu0 %v303
    %367 = vmatpush1.bf16.msra.mxu0 %v302
    %368 = vmatprep.subr.bf16.mxu0 %v305
    %369 = vmatpush1.bf16.msra.mxu0 %v304
    %370 = vmatprep.subr.bf16.mxu0 %v307
    %371 = vmatpush1.bf16.msra.mxu0 %v306
    %372 = vmatprep.subr.bf16.mxu0 %v309
    %373 = vmatpush1.bf16.msra.mxu0 %v308
    %374 = vmatprep.subr.bf16.mxu0 %v311
    %375 = vmatpush1.bf16.msra.mxu0 %v310
    %376 = vmatprep.subr.bf16.mxu0 %v313
    %377 = vmatpush1.bf16.msra.mxu0 %v312
    %378 = vmatprep.mubr.bf16.mxu0 %v141
    %379 = vmatmul.mubr.bf16.gmra.mrb[0].mxu0 %v140
    %v380 = vpop.f32.mrb[0].mxu0
    %v381 = vadd.f32 %v179, %v380
    %v382 = vpop.f32.mrb[0].mxu0
    %v383 = vadd.f32 %v183, %v382
    %v384 = vpop.f32.mrb[0].mxu0
    %v385 = vpop.f32.mrb[0].mxu0
    %386 = vdwg.mxu0
    %v387 = vmax.f32 %v381, 0.0
    %v388 = vmax.f32 %v383, 0.0
    %v389 = vld [vmem:[%s5] sm:$0x3]
    %v391 = vlaneseq
    %v392 = vshrl.u32 %v391, 7
    %v393 = vsub.s32 0, %v392
    %v394 = vrot.slane %v389, %v393
    %v395 = vlaneseq
    %v396 = vshrl.u32 %v395, 7
    %v397 = vsub.s32 1, %v396
    %v398 = vrot.slane %v389, %v397
    %v401 = vmul.f32 %v387, %v394
    %v402 = vmul.f32 %v388, %v398
    %v403 = vadd.f32 %v401, %v402
    %404 = vadd.xlane.f32.xlu0 %v403
    %v405 = vpop.xlane.xlu0 %404
    %s406 = sld [smem:[#allocation2]]
    %v407 = vstv %s406
    %v408 = vadd.f32 %v405, %v407
    %v410 = vlaneseq
    %v411 = vand.u32 %v410, 127
    %v412 = vlaneseq
    %v413 = vshrl.u32 %v412, 7
    %v414 = vsub.s32 %v411, %v413
    %v415 = vrot.slane %v408, %v414
    %vm417 = vcmask 57344
    %418 = vst.msk [vmem:[#allocation9] sm:$0x1] %vm417, %v415
    // Predicated region
    $region42: #{critic_forward.1} parent=1 // pred_check
      _
    $region43: #{critic_forward.1} parent=1 // pred_check_branch
      %420 = sbr.rel (0) target = $region45
    $region44: #{critic_forward.1} parent=1 // pred_region
      %s422 = ssub.s32 16, 16
      %423 = vsyncadd [#allocation5], %s422
      %s425 = sshll.u32 [#allocation9], 4
      %s426 = int_to_ptr.vmem [resolvable:$true] %s425
      %428 = dma.vmem_to_hbm [thread:$0]  %s426, 16, %s7, [#allocation5]
    $region45: #{critic_forward.1} parent=1 // pred_fallthru
      _
    // Predicated region
    $region46: #{critic_forward.1} parent=1 // pred_check
      _
    $region47: #{critic_forward.1} parent=1 // pred_check_branch
      %430 = sbr.rel (0) target = $region49
    $region48: #{critic_forward.1} parent=1 // pred_region
      %431 = dma.done [#allocation5], 16
    $region49: #{critic_forward.1} parent=1 // pred_fallthru
      _
    %432 = vsyncpa [#allocation4], 1
    %433 = vsyncpa [#allocation7], 1
    %434 = vsyncpa [#allocation5], 1

</llo_original>
